<compile_context>
chip_gen: v6e
topology: v6e:2x2x1
jax: 0.10.0
libtpu: 0.0.40
codegen_flags: <defaults>
</compile_context>

<pallas_src>
import functools

import numpy as np
import jax
import jax.numpy as jnp
from jax import lax
from jax.experimental import pallas as pl
from jax.experimental.pallas import tpu as pltpu

SELECTED_NUM = 8
KERNEL_SIZE = 6
_EPS = 1e-8


def _round_up(x, m):
    return ((x + m - 1) // m) * m


# ----------------------------------------------------------------------------
# Host-side glue: mask2roi + uncertain_kernel_search (data-dependent gather).
# ----------------------------------------------------------------------------
def mask2roi_np(mask):
    mask = np.asarray(mask)
    mask_ = mask.copy()
    mask_[mask_ == 255] = 0
    roi = np.zeros_like(mask, dtype=np.int32)
    roi[mask == 255] = 1
    roi[mask_ >= 1] = 2
    return roi


def uncertain_kernel_search(patch_tokens, masks,
                            selected_num=SELECTED_NUM, kernel_size=KERNEL_SIZE):
    """Replicates URELoss_neg.uncertain_kernel_search, returning fixed-size
    padded RAW tokens (B, selected_num, C) and a (B, selected_num) validity
    mask.  Tokens are gathered before normalization; since F.normalize over the
    channel dim is per-pixel, normalizing the gathered vectors (done inside the
    Pallas kernel, deferred past the matmul) is mathematically identical.
    # TODO(synk): torch.randperm-based random subset selection replaced by a
    # deterministic scan-order (first-K) selection; all other logic matches.
    """
    pt = np.asarray(patch_tokens)
    roi = mask2roi_np(masks)
    B, C, H, W = pt.shape
    margin = kernel_size // 2
    tokens = np.zeros((B, selected_num, C), dtype=np.float32)
    valid = np.zeros((B, selected_num), dtype=np.float32)
    for b in range(B):
        interior = roi[b, margin:H - margin, margin:W - margin]
        cand = np.argwhere(interior == 1)          # row-major, like torch.nonzero
        sel = []
        for h0, w0 in cand:
            win = roi[b, h0:h0 + kernel_size, w0:w0 + kernel_size]
            if win.sum() / float(kernel_size * kernel_size) >= 1.2:
                sel.append((int(h0), int(w0)))
        if len(sel) > selected_num:
            sel = sel[:selected_num]
        else:
            add_idx = (selected_num - len(sel)) // 4
            pos = np.argwhere(interior == 2)
            if pos.shape[0] < add_idx:
                pos = np.argwhere(interior >= 0)
            for h0, w0 in pos[:add_idx]:
                sel.append((int(h0), int(w0)))
        for s, (h0, w0) in enumerate(sel[:selected_num]):
            tokens[b, s, :] = pt[b, :, h0, w0]
            valid[b, s] = 1.0
    return jnp.asarray(tokens), jnp.asarray(valid)


# ----------------------------------------------------------------------------
# Pallas kernel: one grid step = `block_b` batches.
#   un_ref  : (block_b*Sp, Cp)  raw uncertain tokens; invalid/pad rows are zero
#   kt_ref  : (block_b*Kp, Cp)  raw cls tokens (natural, lane-dense layout)
#   wk_ref  : (block_b, 1, Kp)  fused class weights (incl. 1/||ct||), f32
#   out_ref : (8, 128)          broadcast-filled partial loss sum for this step
# ----------------------------------------------------------------------------
def _ure_kernel(un_ref, kt_ref, wk_ref, out_ref, *, block_b, sp, kp):
    un = un_ref[...]                                     # (block_b*Sp, Cp)
    un32 = un.astype(jnp.float32)
    # Deferred L2 normalization of the uncertain tokens: rsqrt on the (rows,1)
    # squared norms instead of dividing the (rows,Cp) operand.
    # sqrt(max(ss, eps^2)) == max(||x||, eps), matching F.normalize's eps.
    inv_un = lax.rsqrt(jnp.maximum(
        jnp.sum(un32 * un32, axis=-1, keepdims=True), _EPS * _EPS))  # (rows, 1)

    kt = kt_ref[...]                                     # (block_b*Kp, Cp)
    wk = wk_ref[...]                                     # (block_b, 1, Kp) f32

    total = jnp.zeros((1, 1), jnp.float32)
    for b in range(block_b):                             # static unroll
        rows = un[b * sp:(b + 1) * sp, :]                # (Sp, Cp)
        ct_b = kt[b * kp:(b + 1) * kp, :]                # (Kp, Cp)
        # Raw (un-normalized) similarities on the MXU with f32 accumulation,
        # contracting the shared lane-dense channel axis.
        raw = lax.dot_general(rows, ct_b,
                              dimension_numbers=(((1,), (1,)), ((), ())),
                              preferred_element_type=jnp.float32)   # (Sp, Kp)
        contrib = jnp.sum(jnp.abs(raw) * wk[b], axis=-1, keepdims=True)  # (Sp,1)
        total = total + jnp.sum(inv_un[b * sp:(b + 1) * sp, :] * contrib,
                                keepdims=True)
    # Lane-dense unmasked store; wrapper reads element [0, 0] of each step tile.
    out_ref[...] = jnp.broadcast_to(total, out_ref.shape)


def ure_loss_pallas(un_tokens, un_valid, cls_tokens_visual, cls_labels,
                    block_b=None):
    B, S, C = un_tokens.shape
    K = cls_tokens_visual.shape[1]

    if block_b is None:
        # Amortize per-grid-step overhead, but keep >=2 "parallel" grid entries
        # whenever B allows so both v7x TensorCores get work.
        block_b = max(1, min(8, B // 2)) if B >= 2 else 1

    grid_b = -(-B // block_b)                 # cdiv
    b_pad = grid_b * block_b
    c_pad = _round_up(C, 128)                 # lane-dense contraction axis
    s_pad = _round_up(S, 8)                   # sublane-aligned stacked rows
    k_pad = _round_up(K, 8)

    valid_f32 = un_valid.astype(jnp.float32)

    # Exact fused class weights (positive/background terms + cls-token inverse
    # L2 norms), computed once in the wrapper in f32:
    #   per_token = 0.5 + inv_un * sum_k |un_raw . ct_raw_k| * wk_k
    ct32 = cls_tokens_visual.astype(jnp.float32)
    lab = cls_labels.astype(jnp.float32)
    bkg = (lab == 0.0).astype(jnp.float32)
    inv_ct = 1.0 / jnp.maximum(jnp.sqrt(jnp.sum(ct32 * ct32, axis=-1)), _EPS)    # (B, K)
    wk = 0.5 * (bkg / (jnp.sum(bkg, axis=-1, keepdims=True) + 1.0)
                - lab / (jnp.sum(lab, axis=-1, keepdims=True) + 1.0)) * inv_ct   # (B, K)

    # Zero invalid tokens so they contribute exactly zero inside the kernel
    # (validity count and the 0.5 constant are handled in the wrapper below).
    un = un_tokens * valid_f32[..., None].astype(un_tokens.dtype)

    # Zero-padding changes neither dot products, norms, nor the weighted sums.
    un = jnp.pad(un, ((0, b_pad - B), (0, s_pad - S), (0, c_pad - C)))
    ct = jnp.pad(cls_tokens_visual,
                 ((0, b_pad - B), (0, k_pad - K), (0, c_pad - C)))
    wk = jnp.pad(wk, ((0, b_pad - B), (0, k_pad - K)))[:, None, :]   # (b_pad,1,Kp)

    # Stack batches into 2-D lane-dense operand slabs (row counts are multiples
    # of 8; with S=K=8 an even block_b also makes them multiples of 16 for bf16).
    un2d = un.reshape(b_pad * s_pad, c_pad)
    kt2d = ct.reshape(b_pad * k_pad, c_pad)

    kernel = functools.partial(_ure_kernel, block_b=block_b, sp=s_pad, kp=k_pad)

    psum = pl.pallas_call(
        kernel,
        out_shape=jax.ShapeDtypeStruct((grid_b, 8, 128), jnp.float32),
        grid=(grid_b,),
        in_specs=[
            pl.BlockSpec((block_b * s_pad, c_pad), lambda g: (g, 0)),
            pl.BlockSpec((block_b * k_pad, c_pad), lambda g: (g, 0)),
            pl.BlockSpec((block_b, 1, k_pad), lambda g: (g, 0, 0)),
        ],
        out_specs=pl.BlockSpec((None, 8, 128), lambda g: (g, 0, 0)),
        compiler_params=pltpu.CompilerParams(
            dimension_semantics=("parallel",)),
    )(un2d, kt2d, wk)

    total = jnp.sum(psum[:, 0, 0])
    n = jnp.sum(valid_f32)
    # sum_s valid*(0.5 + inv_un*contrib) / n  ==  0.5 + total / n   (for n > 0).
    # Guard against the no-valid-token case (a skipped loop in PyTorch).
    return jnp.where(n > 0.0, 0.5 + total / jnp.maximum(n, 1.0), 0.0)


def ure_loss_neg(cls_tokens_visual, patch_tokens, masks, cls_labels):
    un_tokens, un_valid = uncertain_kernel_search(patch_tokens, masks)
    return ure_loss_pallas(un_tokens, un_valid, cls_tokens_visual, cls_labels)


# Pure-JAX reference of the same math (sanity check of the kernel).
def _ure_loss_ref(un_tokens, un_valid, cls_tokens_visual, cls_labels):
    un = un_tokens.astype(jnp.float32)
    ct = cls_tokens_visual.astype(jnp.float32)
    lab = cls_labels.astype(jnp.float32)
    val = un_valid.astype(jnp.float32)
    un_n = un / jnp.maximum(jnp.linalg.norm(un, axis=-1, keepdims=True), _EPS)
    ct_n = ct / jnp.maximum(jnp.linalg.norm(ct, axis=-1, keepdims=True), _EPS)
    logits = jnp.abs(jnp.einsum("bsc,bkc->bsk", un_n, ct_n))
    bkg = (lab == 0.0).astype(jnp.float32)
    pos_den = jnp.sum(lab, axis=-1, keepdims=True) + 1.0
    bkg_den = jnp.sum(bkg, axis=-1, keepdims=True) + 1.0
    pos_num = jnp.sum(lab[:, None, :] * logits, axis=-1)
    bkg_num = jnp.sum(bkg[:, None, :] * logits, axis=-1)
    per_token = 0.5 * (1.0 - pos_num / pos_den) + 0.5 * (bkg_num / bkg_den)
    return jnp.sum(per_token * val) / jnp.maximum(jnp.sum(val), 1.0)


if __name__ == "__main__":
    B, C, H, W, K = 2, 32, 16, 16, 8
    key = jax.random.PRNGKey(0)
    k1, k2 = jax.random.split(key)
    patch_tokens = jax.random.normal(k1, (B, C, H, W), dtype=jnp.float32)
    cls_tokens_visual = jax.random.normal(k2, (B, K, C), dtype=jnp.float32)

    masks = np.zeros((B, H, W), dtype=np.int32)
    # batch 0: an uncertain (255) stripe adjacent to a foreground-class stripe so
    # some 6x6 windows have mean >= 1.2 (exercises the main selection branch).
    masks[0, 2:14, 2:8] = 255
    masks[0, 2:14, 8:14] = 1
    # batch 1: only an uncertain region -> no window passes, exercises fallback.
    masks[1, 4:12, 4:12] = 255
    masks = jnp.asarray(masks)

    cls_labels = jnp.asarray(
        [[0., 1., 0., 1., 0., 0., 1., 0.],
         [0., 0., 1., 0., 0., 0., 0., 1.]], dtype=jnp.float32)

    # Host-side data-dependent gather once, then the Pallas hot path.
    un_tokens, un_valid = uncertain_kernel_search(patch_tokens, masks)

    # f32 path (tight check; only rsqrt approximation error remains in-kernel).
    loss = jax.block_until_ready(
        ure_loss_pallas(un_tokens, un_valid, cls_tokens_visual, cls_labels))
    ref = _ure_loss_ref(un_tokens, un_valid, cls_tokens_visual, cls_labels)
    assert np.isfinite(float(loss))
    np.testing.assert_allclose(float(loss), float(ref), rtol=3e-3, atol=1e-3)

    # bf16 path: tokens stay bf16 into the MXU, elementwise math in f32.
    un_bf16 = un_tokens.astype(jnp.bfloat16)
    ct_bf16 = cls_tokens_visual.astype(jnp.bfloat16)
    loss_bf16 = jax.block_until_ready(
        ure_loss_pallas(un_bf16, un_valid, ct_bf16, cls_labels))
    ref_bf16 = _ure_loss_ref(un_bf16.astype(jnp.float32), un_valid,
                             ct_bf16.astype(jnp.float32), cls_labels)
    assert np.isfinite(float(loss_bf16))
    np.testing.assert_allclose(float(loss_bf16), float(ref_bf16),
                               rtol=5e-3, atol=2e-3)

    print("KERNEL_OK")
</pallas_src>

<mosaic_0001>
module attributes {stable_mosaic.version = 11 : i64} {
  func.func @_ure_kernel(%arg0: i32, %arg1: memref<8x128xf32, #tpu.memory_space<vmem>>, %arg2: memref<8x128xf32, #tpu.memory_space<vmem>>, %arg3: memref<1x1x8xf32, #tpu.memory_space<vmem>>, %arg4: memref<1x8x128xf32, #tpu.memory_space<vmem>>) attributes {dimension_semantics = [#tpu.dimension_semantics<parallel>], iteration_bounds = array<i64: 2>, scalar_prefetch = 0 : i64, scratch_operands = 0 : i64, tpu.core_type = #tpu.core_type<tc>, window_params = [{transform_indices = @transform_0, window_bounds = array<i64: 8, 128>}, {transform_indices = @transform_1, window_bounds = array<i64: 8, 128>}, {transform_indices = @transform_2, window_bounds = array<i64: 1, 1, 8>}, {transform_indices = @transform_3, window_bounds = array<i64: 1, 8, 128>}]} {
    %c0 = arith.constant 0 : index
    %c0_0 = arith.constant 0 : index
    %0 = vector.load %arg1[%c0, %c0_0] : memref<8x128xf32, #tpu.memory_space<vmem>>, vector<8x128xf32>
    %1 = arith.mulf %0, %0 : vector<8x128xf32>
    %cst = arith.constant dense<0.000000e+00> : vector<8xf32>
    %2 = vector.multi_reduction <add>, %1, %cst [1] : vector<8x128xf32> to vector<8xf32>
    %3 = vector.shape_cast %2 : vector<8xf32> to vector<8x1xf32>
    %cst_1 = arith.constant 1.000000e-16 : f32
    %4 = vector.broadcast %cst_1 : f32 to vector<8x1xf32>
    %5 = arith.maximumf %3, %4 : vector<8x1xf32>
    %6 = math.rsqrt %5 : vector<8x1xf32>
    %c0_2 = arith.constant 0 : index
    %c0_3 = arith.constant 0 : index
    %7 = vector.load %arg2[%c0_2, %c0_3] : memref<8x128xf32, #tpu.memory_space<vmem>>, vector<8x128xf32>
    %c0_4 = arith.constant 0 : index
    %c0_5 = arith.constant 0 : index
    %c0_6 = arith.constant 0 : index
    %8 = vector.load %arg3[%c0_4, %c0_5, %c0_6] : memref<1x1x8xf32, #tpu.memory_space<vmem>>, vector<1x1x8xf32>
    %cst_7 = arith.constant 0.000000e+00 : f32
    %9 = vector.broadcast %cst_7 : f32 to vector<1x1xf32>
    %cst_8 = arith.constant dense<0.000000e+00> : vector<8x8xf32>
    %10 = tpu.matmul %0, %7, %cst_8 {dimension_numbers = #tpu.dot_dimension_numbers<[1], [1], [0], [0], [0, 0, 1, 0], [], []>} : vector<8x128xf32>, vector<8x128xf32>, vector<8x8xf32> -> vector<8x8xf32>
    %11 = math.absf %10 : vector<8x8xf32>
    %12 = vector.shape_cast %8 : vector<1x1x8xf32> to vector<1x8xf32>
    %13 = vector.broadcast %12 : vector<1x8xf32> to vector<8x8xf32>
    %14 = arith.mulf %11, %13 : vector<8x8xf32>
    %cst_9 = arith.constant dense<0.000000e+00> : vector<8xf32>
    %15 = vector.multi_reduction <add>, %14, %cst_9 [1] : vector<8x8xf32> to vector<8xf32>
    %16 = vector.shape_cast %15 : vector<8xf32> to vector<8x1xf32>
    %17 = arith.mulf %6, %16 : vector<8x1xf32>
    %18 = vector.shape_cast %17 : vector<8x1xf32> to vector<1x8x1xf32>
    %cst_10 = arith.constant dense<0.000000e+00> : vector<1xf32>
    %19 = vector.multi_reduction <add>, %18, %cst_10 [1, 2] : vector<1x8x1xf32> to vector<1xf32>
    %20 = vector.shape_cast %19 : vector<1xf32> to vector<1x1x1xf32>
    %21 = vector.extract %20[0, 0, 0] : f32 from vector<1x1x1xf32>
    %22 = vector.broadcast %21 : f32 to vector<1x1xf32>
    %23 = arith.addf %9, %22 : vector<1x1xf32>
    %24 = vector.shape_cast %23 : vector<1x1xf32> to vector<1x1xf32>
    %25 = vector.broadcast %24 : vector<1x1xf32> to vector<8x128xf32>
    %c0_11 = arith.constant 0 : index
    %c0_12 = arith.constant 0 : index
    %c0_13 = arith.constant 0 : index
    %26 = vector.load %arg4[%c0_11, %c0_12, %c0_13] : memref<1x8x128xf32, #tpu.memory_space<vmem>>, vector<1x8x128xf32>
    %27 = vector.shape_cast %26 : vector<1x8x128xf32> to vector<8x128xf32>
    %28 = vector.shape_cast %25 : vector<8x128xf32> to vector<1x8x128xf32>
    tpu.vector_store %arg4[%c0_11, %c0_12, %c0_13], %28 {strides = array<i32>} : memref<1x8x128xf32, #tpu.memory_space<vmem>>, vector<1x8x128xf32>,
    return
  }
  func.func @transform_0(%arg0: i32) -> (i32, i32) {
    %c0_i32 = arith.constant 0 : i32
    %c0_i32_0 = arith.constant 0 : i32
    return %arg0, %c0_i32 : i32, i32
  }
  func.func @transform_1(%arg0: i32) -> (i32, i32) {
    %c0_i32 = arith.constant 0 : i32
    %c0_i32_0 = arith.constant 0 : i32
    return %arg0, %c0_i32 : i32, i32
  }
  func.func @transform_2(%arg0: i32) -> (i32, i32, i32) {
    %c0_i32 = arith.constant 0 : i32
    %c0_i32_0 = arith.constant 0 : i32
    %c0_i32_1 = arith.constant 0 : i32
    return %arg0, %c0_i32, %c0_i32_0 : i32, i32, i32
  }
  func.func @transform_3(%arg0: i32) -> (i32, i32, i32) {
    %c0_i32 = arith.constant 0 : i32
    %c0_i32_0 = arith.constant 0 : i32
    %c0_i32_1 = arith.constant 0 : i32
    return %arg0, %c0_i32, %c0_i32_0 : i32, i32, i32
  }
}

</mosaic_0001>

<llo_original>
// kernel: tpu_custom_call.1
$region0: #{tpu_custom_call.1}
  #allocation0 [shape = 'u32[]', space=smem, size = 0x4, offset = 0x4, fixed_abs, tag = 'smem constant byte address 0x4 - core index']
  #allocation1 [shape = 'u32[144,128]{1,0:T(1,128)}', space=vmem, size = 0x12000, scoped, tag = 'internal scratch']
  %s0 = inlined_call_operand.hbm [shape: f32[16,128], index: 0, kind: input, shape index: {}]
  %s1 = inlined_call_operand.hbm [shape: f32[16,128], index: 1, kind: input, shape index: {}]
  %s2 = inlined_call_operand.vmem [shape: f32[2,1,8], index: 2, kind: input, shape index: {}]
  %s3 = inlined_call_operand.hbm [shape: f32[2,8,128], index: 3, kind: output, shape index: {}]
  %s4 = sld [smem:[#allocation0]]
  $region53: #{tpu_custom_call.1} parent=0
    _
  %s6 = ssub.s32 1, %s4
  %s7 = scalar_select 0, %s6, %s4
  $region1: #{tpu_custom_call.1} parent=0
    #allocation2 [shape = 'u8[8192]{0}', space=vmem, size = 0x2000, scoped, tag = 'input window, operand 0']
    #allocation3 [shape = 's32[2]{0}', space=sflag, size = 0x8, scoped, tag = 'scoped memory for tpu_custom_call.1']
    #allocation4 [shape = 's32[2]{0}', space=sflag, size = 0x8, scoped, tag = 'scoped memory for tpu_custom_call.1']
    #allocation5 [shape = 'u8[8192]{0}', space=vmem, size = 0x2000, scoped, tag = 'input window, operand 1']
    #allocation6 [shape = 's32[2]{0}', space=sflag, size = 0x8, scoped, tag = 'scoped memory for tpu_custom_call.1']
    #allocation7 [shape = 'u8[8192]{0}', space=vmem, size = 0x2000, scoped, tag = 'output window, operand 0']
    %8 = vsyncpa [#allocation3], 0
    %s9 = scalar_lea.sflag [#allocation3], 1
    %10 = vsyncpa %s9, 0
    %11 = vsyncpa [#allocation6], 0
    %s12 = scalar_lea.sflag [#allocation6], 1
    %13 = vsyncpa %s12, 0
    %14 = vsyncpa [#allocation4], 0
    %s15 = scalar_lea.sflag [#allocation4], 1
    %16 = vsyncpa %s15, 0
    loop: start=0, step=1, limit=4
    $region2: #{tpu_custom_call.1} parent=1 // loop_pre_header
      _
    $region3: #{tpu_custom_call.1} parent=1 // loop_header
      %s18 = sphi 0, %s22
      %p19 = scmp.ge.s32.totalorder %s18, 4
      %s28 = sphi 0, %s30
      %s31 = sphi 0, %s28
      %s32 = sphi 0, %s31
      %s48 = sphi 0, %s32
      %s54 = sphi 0, %s56
      %s57 = sphi 0, %s54
      %s58 = sphi 0, %s57
      %s74 = sphi 0, %s58
      %s80 = sphi 0, %s82
      %s83 = sphi 0, %s80
      %s84 = sphi 0, %s83
      %s100 = sphi 0, %s84
      %s106 = sphi 0, %s108
      %s109 = sphi 0, %s106
      %s110 = sphi 0, %s109
      %s126 = sphi 0, %s110
    $region4: #{tpu_custom_call.1} parent=1 // loop_header_branch
      %21 = sbr.rel (%p19) target = $region8
    $region5: #{tpu_custom_call.1} parent=1 // loop_body
      %s23 = ssub.s32 %s18, 1
      %s24 = ssub.s32 %s18, 2
      %s25 = sadd.s32 %s18, 1
      %s26 = ssub.s32 %s18, %s25
      %p27 = scmp.eq.s32.totalorder %s26, 0
      %s29 = sadd.s32 %s28, 1
      %s30 = scalar_select %p27, %s28, %s29
      %p33 = pneg %p27
      %p34 = scmp.eq.s32.totalorder %s18, 1
      %p35 = por %p33, %p34
      %p36 = scmp.ne.s32.totalorder %s28, %s31
      %p37 = scmp.eq.s32.totalorder %s18, 0
      %p38 = por %p36, %p37
      %p39 = scmp.ne.s32.totalorder %s28, %s31
      %p40 = scmp.eq.s32.totalorder %s23, 1
      %p41 = por %p39, %p40
      %p42 = scmp.ne.s32.totalorder %s31, %s32
      %p43 = scmp.eq.s32.totalorder %s23, 0
      %p44 = por %p42, %p43
      %p45 = scmp.ne.s32.totalorder %s31, %s32
      %p46 = scmp.eq.s32.totalorder %s24, 1
      %p47 = por %p45, %p46
      %p49 = scmp.ne.s32.totalorder %s32, %s48
      %p50 = scmp.eq.s32.totalorder %s24, 0
      %p51 = por %p49, %p50
      %s52 = ssub.s32 %s18, %s25
      %p53 = scmp.eq.s32.totalorder %s52, 0
      %s55 = sadd.s32 %s54, 1
      %s56 = scalar_select %p53, %s54, %s55
      %p59 = pneg %p53
      %p60 = scmp.eq.s32.totalorder %s18, 1
      %p61 = por %p59, %p60
      %p62 = scmp.ne.s32.totalorder %s54, %s57
      %p63 = scmp.eq.s32.totalorder %s18, 0
      %p64 = por %p62, %p63
      %p65 = scmp.ne.s32.totalorder %s54, %s57
      %p66 = scmp.eq.s32.totalorder %s23, 1
      %p67 = por %p65, %p66
      %p68 = scmp.ne.s32.totalorder %s57, %s58
      %p69 = scmp.eq.s32.totalorder %s23, 0
      %p70 = por %p68, %p69
      %p71 = scmp.ne.s32.totalorder %s57, %s58
      %p72 = scmp.eq.s32.totalorder %s24, 1
      %p73 = por %p71, %p72
      %p75 = scmp.ne.s32.totalorder %s58, %s74
      %p76 = scmp.eq.s32.totalorder %s24, 0
      %p77 = por %p75, %p76
      %s78 = ssub.s32 %s18, %s25
      %p79 = scmp.eq.s32.totalorder %s78, 0
      %s81 = sadd.s32 %s80, 1
      %s82 = scalar_select %p79, %s80, %s81
      %p85 = pneg %p79
      %p86 = scmp.eq.s32.totalorder %s18, 1
      %p87 = por %p85, %p86
      %p88 = scmp.ne.s32.totalorder %s80, %s83
      %p89 = scmp.eq.s32.totalorder %s18, 0
      %p90 = por %p88, %p89
      %p91 = scmp.ne.s32.totalorder %s80, %s83
      %p92 = scmp.eq.s32.totalorder %s23, 1
      %p93 = por %p91, %p92
      %p94 = scmp.ne.s32.totalorder %s83, %s84
      %p95 = scmp.eq.s32.totalorder %s23, 0
      %p96 = por %p94, %p95
      %p97 = scmp.ne.s32.totalorder %s83, %s84
      %p98 = scmp.eq.s32.totalorder %s24, 1
      %p99 = por %p97, %p98
      %p101 = scmp.ne.s32.totalorder %s84, %s100
      %p102 = scmp.eq.s32.totalorder %s24, 0
      %p103 = por %p101, %p102
      %s104 = ssub.s32 %s18, %s25
      %p105 = scmp.eq.s32.totalorder %s104, 0
      %s107 = sadd.s32 %s106, 1
      %s108 = scalar_select %p105, %s106, %s107
      %p111 = pneg %p105
      %p112 = scmp.eq.s32.totalorder %s18, 1
      %p113 = por %p111, %p112
      %p114 = scmp.ne.s32.totalorder %s106, %s109
      %p115 = scmp.eq.s32.totalorder %s18, 0
      %p116 = por %p114, %p115
      %p117 = scmp.ne.s32.totalorder %s106, %s109
      %p118 = scmp.eq.s32.totalorder %s23, 1
      %p119 = por %p117, %p118
      %p120 = scmp.ne.s32.totalorder %s109, %s110
      %p121 = scmp.eq.s32.totalorder %s23, 0
      %p122 = por %p120, %p121
      %p123 = scmp.ne.s32.totalorder %s109, %s110
      %p124 = scmp.eq.s32.totalorder %s24, 1
      %p125 = por %p123, %p124
      %p127 = scmp.ne.s32.totalorder %s110, %s126
      %p128 = scmp.eq.s32.totalorder %s24, 0
      %p129 = por %p127, %p128
      %p130 = scmp.le.s32.totalorder 1, %s18
      %p131 = scmp.lt.s32.totalorder %s18, 3
      %p132 = pnand %p130, %p131
      %p133 = pneg %p132
      // Predicated region
      $region9: #{tpu_custom_call.1} parent=5 // pred_check
        _
      $region10: #{tpu_custom_call.1} parent=5 // pred_check_branch
        %135 = sbr.rel (%p132) target = $region12
      $region11: #{tpu_custom_call.1} parent=5 // pred_region
        %s136 = ssub.s32 %s18, 1
      $region12: #{tpu_custom_call.1} parent=5 // pred_fallthru
        _
      %p137 = scmp.lt.s32.totalorder %s18, 2
      // Predicated region
      $region13: #{tpu_custom_call.1} parent=5 // pred_check
        %p138 = pneg %p137
      $region14: #{tpu_custom_call.1} parent=5 // pred_check_branch
        %140 = sbr.rel (%p138) target = $region16
      $region15: #{tpu_custom_call.1} parent=5 // pred_region
        // Predicated region
        $region17: #{tpu_custom_call.1} parent=15 // pred_check
          %p141 = pneg %p38
        $region18: #{tpu_custom_call.1} parent=15 // pred_check_branch
          %143 = sbr.rel (%p141) target = $region20
        $region19: #{tpu_custom_call.1} parent=15 // pred_region
          %s144 = sand.u32 %s28, 1
          %s145 = scalar_lea.sflag [#allocation3], %s144
          %s146 = sand.u32 %s28, 1
          %s147 = smul.addr %s146, 8
          %s148 = scalar_lea.vmem [#allocation2], %s147
          %s150 = ssub.s32 128, 128
          %151 = vsyncadd %s145, %s150
          %s152 = smul.addr %s18, 128
          %s153 = scalar_lea.hbm %s0, %s152
          %s155 = sshll.u32 %s148, 4
          %s156 = int_to_ptr.vmem [resolvable:$true] %s155
          %158 = dma.hbm_to_vmem [thread:$0]  %s153, 128, %s156, %s145
        $region20: #{tpu_custom_call.1} parent=15 // pred_fallthru
          _
        // Predicated region
        $region21: #{tpu_custom_call.1} parent=15 // pred_check
          %p159 = pneg %p64
        $region22: #{tpu_custom_call.1} parent=15 // pred_check_branch
          %161 = sbr.rel (%p159) target = $region24
        $region23: #{tpu_custom_call.1} parent=15 // pred_region
          %s162 = sand.u32 %s54, 1
          %s163 = scalar_lea.sflag [#allocation6], %s162
          %s164 = sand.u32 %s54, 1
          %s165 = smul.addr %s164, 8
          %s166 = scalar_lea.vmem [#allocation5], %s165
          %s168 = ssub.s32 128, 128
          %169 = vsyncadd %s163, %s168
          %s170 = smul.addr %s18, 128
          %s171 = scalar_lea.hbm %s1, %s170
          %s173 = sshll.u32 %s166, 4
          %s174 = int_to_ptr.vmem [resolvable:$true] %s173
          %176 = dma.hbm_to_vmem [thread:$0]  %s171, 128, %s174, %s163
        $region24: #{tpu_custom_call.1} parent=15 // pred_fallthru
          _
        // Predicated region
        $region25: #{tpu_custom_call.1} parent=15 // pred_check
          %p177 = pneg %p90
        $region26: #{tpu_custom_call.1} parent=15 // pred_check_branch
          %179 = sbr.rel (%p177) target = $region28
        $region27: #{tpu_custom_call.1} parent=15 // pred_region
          %p180 = scmp.lt.s32.totalorder %s18, 1
          %s181 = scalar_select %p180, %s18, 1
          %s182 = scalar_lea.vmem %s2, %s181
        $region28: #{tpu_custom_call.1} parent=15 // pred_fallthru
          _
      $region16: #{tpu_custom_call.1} parent=5 // pred_fallthru
        _
      %p183 = scmp.le.s32.totalorder 1, %s18
      %p184 = scmp.lt.s32.totalorder %s18, 3
      %p185 = pnand %p183, %p184
      %p186 = pneg %p185
      // Predicated region
      $region29: #{tpu_custom_call.1} parent=5 // pred_check
        _
      $region30: #{tpu_custom_call.1} parent=5 // pred_check_branch
        %188 = sbr.rel (%p185) target = $region32
      $region31: #{tpu_custom_call.1} parent=5 // pred_region
        %s189 = ssub.s32 %s18, 1
        %s190 = sand.u32 %s31, 1
        %s191 = scalar_lea.sflag [#allocation3], %s190
        %s192 = sand.u32 %s31, 1
        %s193 = smul.addr %s192, 8
        %s194 = scalar_lea.vmem [#allocation2], %s193
        // Predicated region
        $region33: #{tpu_custom_call.1} parent=31 // pred_check
          %p195 = pneg %p44
        $region34: #{tpu_custom_call.1} parent=31 // pred_check_branch
          %197 = sbr.rel (%p195) target = $region36
        $region35: #{tpu_custom_call.1} parent=31 // pred_region
          %198 = dma.done %s191, 128
        $region36: #{tpu_custom_call.1} parent=31 // pred_fallthru
          _
        %s199 = sand.u32 %s57, 1
        %s200 = scalar_lea.sflag [#allocation6], %s199
        %s201 = sand.u32 %s57, 1
        %s202 = smul.addr %s201, 8
        %s203 = scalar_lea.vmem [#allocation5], %s202
        // Predicated region
        $region37: #{tpu_custom_call.1} parent=31 // pred_check
          %p204 = pneg %p70
        $region38: #{tpu_custom_call.1} parent=31 // pred_check_branch
          %206 = sbr.rel (%p204) target = $region40
        $region39: #{tpu_custom_call.1} parent=31 // pred_region
          %207 = dma.done %s200, 128
        $region40: #{tpu_custom_call.1} parent=31 // pred_fallthru
          _
        %s208 = sand.u32 %s31, 1
        %s209 = scalar_lea.sflag [#allocation3], %s208
        %s210 = sand.u32 %s31, 1
        %s211 = smul.addr %s210, 8
        %s212 = scalar_lea.vmem [#allocation2], %s211
        %p213 = pneg %p44
        %p214 = pneg %p41
        %s215 = sand.u32 %s57, 1
        %s216 = scalar_lea.sflag [#allocation6], %s215
        %s217 = sand.u32 %s57, 1
        %s218 = smul.addr %s217, 8
        %s219 = scalar_lea.vmem [#allocation5], %s218
        %p220 = pneg %p70
        %p221 = pneg %p67
        %p222 = scmp.lt.s32.totalorder %s23, 1
        %s223 = scalar_select %p222, %s23, 1
        %s224 = scalar_lea.vmem %s2, %s223
        %p225 = pneg %p96
        %p226 = pneg %p93
        %p227 = pneg %p122
        %p228 = pneg %p119
        %s229 = sand.u32 %s109, 1
        %s230 = scalar_lea.sflag [#allocation4], %s229
        %s231 = sand.u32 %s109, 1
        %s232 = smul.addr %s231, 8
        %s233 = scalar_lea.vmem [#allocation7], %s232
        %p234 = scmp.lt.s32.totalorder %s23, 1
        %s235 = scalar_select %p234, %s23, 1
        %s236 = scalar_lea.vmem %s2, %s235
        %v237 = vld [vmem:[%s194] sm:$0xff]
        %v238 = vmul.f32 %v237, %v237
        %239 = vadd.xlane.f32.xlu0 %v238
        %v240 = vpop.xlane.xlu0 %239
        %v241 = vmax.f32 %v240, 1e-16
        %v242 = vrsqrt.pop %v241
        %v243 = vld [vmem:[%s203] sm:$0xff]
        %v244 = vld [vmem:[%s236] sm:$0x1]
        %245 = vmatprep.subr.mxu0 0.0
        %246 = vmatpush1.xpose.msra.mxu0 0.0
        %247 = vmatprep.subr.mxu0 0.0
        %248 = vmatpush1.xpose.msra.mxu0 0.0
        %249 = vmatprep.subr.mxu0 0.0
        %250 = vmatpush1.xpose.msra.mxu0 0.0
        %251 = vmatprep.subr.mxu0 0.0
        %252 = vmatpush1.xpose.msra.mxu0 0.0
        %253 = vmatprep.subr.mxu0 0.0
        %254 = vmatpush1.xpose.msra.mxu0 0.0
        %255 = vmatprep.subr.mxu0 0.0
        %256 = vmatpush1.xpose.msra.mxu0 0.0
        %257 = vmatprep.subr.mxu0 0.0
        %258 = vmatpush1.xpose.msra.mxu0 0.0
        %259 = vmatprep.subr.mxu0 0.0
        %260 = vmatpush1.xpose.msra.mxu0 0.0
        %261 = vmatprep.subr.mxu0 0.0
        %262 = vmatpush1.xpose.msra.mxu0 0.0
        %263 = vmatprep.subr.mxu0 0.0
        %264 = vmatpush1.xpose.msra.mxu0 0.0
        %265 = vmatprep.subr.mxu0 0.0
        %266 = vmatpush1.xpose.msra.mxu0 0.0
        %267 = vmatprep.subr.mxu0 0.0
        %268 = vmatpush1.xpose.msra.mxu0 0.0
        %269 = vmatprep.subr.mxu0 0.0
        %270 = vmatpush1.xpose.msra.mxu0 0.0
        %271 = vmatprep.subr.mxu0 0.0
        %272 = vmatpush1.xpose.msra.mxu0 0.0
        %273 = vmatprep.subr.mxu0 0.0
        %274 = vmatpush1.xpose.msra.mxu0 0.0
        %275 = vmatprep.subr.mxu0 0.0
        %276 = vmatpush1.xpose.msra.mxu0 %v243
        %277 = vmatprep.subr.mxu0 0.0
        %278 = vmatpush2.xpose.msra.mxu0 0.0
        %279 = vmatprep.subr.mxu0 0.0
        %280 = vmatpush2.xpose.msra.mxu0 0.0
        %281 = vmatprep.subr.mxu0 0.0
        %282 = vmatpush2.xpose.msra.mxu0 0.0
        %283 = vmatprep.subr.mxu0 0.0
        %284 = vmatpush2.xpose.msra.mxu0 0.0
        %285 = vmatprep.subr.mxu0 0.0
        %286 = vmatpush2.xpose.msra.mxu0 0.0
        %287 = vmatprep.subr.mxu0 0.0
        %288 = vmatpush2.xpose.msra.mxu0 0.0
        %289 = vmatprep.subr.mxu0 0.0
        %290 = vmatpush2.xpose.msra.mxu0 0.0
        %291 = vmatprep.subr.mxu0 0.0
        %292 = vmatpush2.xpose.msra.mxu0 0.0
        %293 = vmatprep.subr.mxu0 0.0
        %294 = vmatpush2.xpose.msra.mxu0 0.0
        %295 = vmatprep.subr.mxu0 0.0
        %296 = vmatpush2.xpose.msra.mxu0 0.0
        %297 = vmatprep.subr.mxu0 0.0
        %298 = vmatpush2.xpose.msra.mxu0 0.0
        %299 = vmatprep.subr.mxu0 0.0
        %300 = vmatpush2.xpose.msra.mxu0 0.0
        %301 = vmatprep.subr.mxu0 0.0
        %302 = vmatpush2.xpose.msra.mxu0 0.0
        %303 = vmatprep.subr.mxu0 0.0
        %304 = vmatpush2.xpose.msra.mxu0 0.0
        %305 = vmatprep.subr.mxu0 0.0
        %306 = vmatpush2.xpose.msra.mxu0 0.0
        %307 = vmatprep.subr.mxu0 0.0
        %308 = vmatpush2.xpose.msra.mxu0 0.0
        %309 = vmatprep.mubr.f32.mxu0 0.0
        %310 = vmatmul.mubr.f32.gmra.mxu0 %v237
        %v311 = vpop.f32.mrf.mxu0
        %v312 = vadd.f32 0.0, %v311
        %v313 = vpop.f32.mrf.mxu0
        %314 = vdwg.mxu0
        %v315 = vand.u32 2147483647, %v312
        %v317 = vlaneseq
        %v318 = vshrl.u32 %v317, 7
        %v319 = vsub.s32 0, %v318
        %v320 = vrot.slane %v244, %v319
        %v322 = vmul.f32 %v315, %v320
        %vm323 = vcmask 64512
        %v324 = vsel %vm323, %v322, 0.0
        %325 = vadd.xlane.f32.xlu0 %v324
        %v326 = vpop.xlane.xlu0 %325
        %v327 = vmul.f32 %v242, %v326
        %vm328 = vcmask 7168
        %v329 = vsel %vm328, %v327, 0.0
        %330 = vadd.xlane.f32.xlu0 %v329
        %v331 = vpop.xlane.xlu0 %330
        %v332 = vrot.slane %v331, 4
        %v333 = vadd.f32 %v331, %v332
        %v334 = vrot.slane %v333, 2
        %v335 = vadd.f32 %v333, %v334
        %v336 = vrot.slane %v335, 1
        %v337 = vadd.f32 %v335, %v336
        %s338 = vtos %v337
        %v339 = vstv %s338
        %v340 = vadd.f32 %v339, 0.0
        %341 = vst [vmem:[%s233] sm:$0xff] %v340
        %s342 = sand.u32 %s109, 1
        %s343 = scalar_lea.sflag [#allocation4], %s342
        %s344 = sand.u32 %s109, 1
        %s345 = smul.addr %s344, 8
        %s346 = scalar_lea.vmem [#allocation7], %s345
        // Predicated region
        $region41: #{tpu_custom_call.1} parent=31 // pred_check
          %p347 = pneg %p119
        $region42: #{tpu_custom_call.1} parent=31 // pred_check_branch
          %349 = sbr.rel (%p347) target = $region44
        $region43: #{tpu_custom_call.1} parent=31 // pred_region
          %s351 = ssub.s32 128, 128
          %352 = vsyncadd %s343, %s351
          %s353 = smul.addr %s23, 128
          %s354 = scalar_lea.hbm %s3, %s353
          %s356 = sshll.u32 %s346, 4
          %s357 = int_to_ptr.vmem [resolvable:$true] %s356
          %359 = dma.vmem_to_hbm [thread:$0]  %s357, 128, %s354, %s343
        $region44: #{tpu_custom_call.1} parent=31 // pred_fallthru
          _
      $region32: #{tpu_custom_call.1} parent=5 // pred_fallthru
        _
      %p360 = scmp.le.s32.totalorder 2, %s18
      // Predicated region
      $region45: #{tpu_custom_call.1} parent=5 // pred_check
        %p361 = pneg %p360
      $region46: #{tpu_custom_call.1} parent=5 // pred_check_branch
        %363 = sbr.rel (%p361) target = $region48
      $region47: #{tpu_custom_call.1} parent=5 // pred_region
        %s364 = ssub.s32 %s18, 2
        // Predicated region
        $region49: #{tpu_custom_call.1} parent=47 // pred_check
          %p365 = pneg %p125
        $region50: #{tpu_custom_call.1} parent=47 // pred_check_branch
          %367 = sbr.rel (%p365) target = $region52
        $region51: #{tpu_custom_call.1} parent=47 // pred_region
          %s368 = sand.u32 %s110, 1
          %s369 = scalar_lea.sflag [#allocation4], %s368
          %s370 = sand.u32 %s110, 1
          %s371 = smul.addr %s370, 8
          %s372 = scalar_lea.vmem [#allocation7], %s371
          %373 = dma.done %s369, 128
        $region52: #{tpu_custom_call.1} parent=47 // pred_fallthru
          _
      $region48: #{tpu_custom_call.1} parent=5 // pred_fallthru
        _
    $region6: #{tpu_custom_call.1} parent=1 // loop_footer
      %s22 = sadd.s32 1, %s18
    $region7: #{tpu_custom_call.1} parent=1 // loop_footer_branch
      %17 = sbr.rel target = $region3
    $region8: #{tpu_custom_call.1} parent=1 // loop_exit
      _
    %374 = vsyncpa [#allocation3], 1
    %s375 = scalar_lea.sflag [#allocation3], 1
    %376 = vsyncpa %s375, 1
    %377 = vsyncpa [#allocation6], 1
    %s378 = scalar_lea.sflag [#allocation6], 1
    %379 = vsyncpa %s378, 1
    %380 = vsyncpa [#allocation4], 1
    %s381 = scalar_lea.sflag [#allocation4], 1
    %382 = vsyncpa %s381, 1

</llo_original>
